<compile_context>
chip_gen: v7x
topology: tpu7x:2x2x1
jax: 0.10.0
libtpu: 0.0.40
codegen_flags: <defaults>
</compile_context>

<pallas_src>
import functools

import numpy as np
import jax
import jax.numpy as jnp
from jax.experimental import pallas as pl
from jax.experimental.pallas import tpu as pltpu

SUBLANE = 8
_ENV_INDEX = {"src": 0, "tgt": 1}


def _round_up(n, m):
    return ((n + m - 1) // m) * m


def _env_predictor_kernel(x_ref, w1_ref, b1_ref, w2t_ref, b2t_ref, scale_ref,
                          o_ref, *, compute_dtype):
    # x_ref:     (TM, F)       activations for this batch tile (original dtype)
    # w1_ref:    (F, H)        bottleneck weight (env column dropped), compute dtype
    # b1_ref:    (1, H)   f32  per-env effective bias (env column folded in)
    # w2t_ref:   (Cs, H)       fc weight transposed, num_class padded to mult of 8
    # b2t_ref:   (Cs, 1)  f32  fc bias as a column
    # scale_ref: (E,)     f32  SMEM; 1/temp per env
    # o_ref:     (Cs, TM)      transposed output block (batch on the lane axis)
    e = pl.program_id(1)

    a = x_ref[...].astype(compute_dtype)
    h = jnp.dot(a, w1_ref[...], preferred_element_type=jnp.float32)
    h = jnp.maximum(h + b1_ref[...], 0.0)                      # (TM, H) f32

    # (Cs, H) . (TM, H) contracting H -> (Cs, TM).  Same dot_general form as
    # q @ k.T in flash attention; produces the output already transposed so the
    # store is lane-dense in the batch dim (no 16x lane padding, no transpose).
    logits_t = jax.lax.dot_general(
        w2t_ref[...], h.astype(compute_dtype),
        dimension_numbers=(((1,), (1,)), ((), ())),
        preferred_element_type=jnp.float32)                    # (Cs, TM)

    # epilogue stays in f32 (v5e has no bf16 VPU path); scalar scale from SMEM.
    o_ref[...] = ((logits_t + b2t_ref[...]) * scale_ref[e]).astype(o_ref.dtype)


def prepare_params(raw, *, compute_dtype=jnp.float32):
    """One-time param prep: fold env column into bias, transpose/pad fc weight.

    ASSUMPTION (matches the PyTorch module): env_embedding is exactly one
    constant column per env -- 0.0 for 'src', 1.0 for 'tgt'.  Its contribution
    to the first matmul is env_val * w1[-1, :], which is folded into a per-env
    effective bias.  If the embedding were learned/multi-dim this fold would be
    invalid.

    Raw weights are stored pre-transposed relative to nn.Linear:
      w1: (in_features + 1, H),  w2: (H, num_class).
    """
    w1 = jnp.asarray(raw["w1"], jnp.float32)
    b1 = jnp.asarray(raw["b1"], jnp.float32)
    w2 = jnp.asarray(raw["w2"], jnp.float32)
    b2 = jnp.asarray(raw["b2"], jnp.float32)
    f1, H = w1.shape
    F = f1 - 1
    C = w2.shape[1]
    Cs = _round_up(C, SUBLANE)     # sublane pad only (8), not lane pad (128)

    # env 0 ('src') -> bias b1 ; env 1 ('tgt') -> bias b1 + w1[-1, :]
    b1_envs = jnp.stack([b1, b1 + w1[F]], axis=0).reshape(2, 1, H)

    w2t = jnp.zeros((Cs, H), compute_dtype).at[:C, :].set(w2.T.astype(compute_dtype))
    b2t = jnp.zeros((Cs, 1), jnp.float32).at[:C, 0].set(b2)

    return {
        "w1x": w1[:F].astype(compute_dtype),   # (F, H)
        "b1_envs": b1_envs,                    # (2, 1, H) f32
        "w2t": w2t,                            # (Cs, H)
        "b2t": b2t,                            # (Cs, 1) f32
        "in_features": F,
        "num_class": C,
        "compute_dtype": compute_dtype,
    }


def env_predictor_forward(x, params, envs=("src", "tgt"), temps=(1.0, 1.0),
                          *, block_m=1024, out_dtype=jnp.float32):
    """Fused inference forward for one or more env settings in a single call.

    Returns logits TRANSPOSED: shape (len(envs), num_class, B).
    (logits[e].T equals the PyTorch module's output for envs[e].)
    Pass out_dtype=jnp.bfloat16 to halve output HBM bytes if the consumer
    tolerates it.  If x is already bf16 upstream, feed it directly (the kernel
    casts in-place); do not add a wrapper-side cast.
    """
    x = jnp.asarray(x)
    B, F = x.shape
    assert F == params["in_features"]
    w1x, w2t, b2t = params["w1x"], params["w2t"], params["b2t"]
    H = w1x.shape[1]
    Cs = w2t.shape[0]
    C = params["num_class"]
    E = len(envs)
    assert len(temps) == E

    env_ids = np.asarray([_ENV_INDEX[e] for e in envs], dtype=np.int32)
    b1_sel = params["b1_envs"][env_ids]                                # (E, 1, H)
    scales = jnp.asarray([1.0 / float(t) for t in temps], jnp.float32)  # (E,)

    tm = min(B, block_m)
    grid_m = pl.cdiv(B, tm)

    kernel = functools.partial(_env_predictor_kernel,
                               compute_dtype=params["compute_dtype"])

    # NOTE: if block_m is raised past ~4096 on v5e (16 MiB scoped-VMEM default),
    # add pltpu.CompilerParams(vmem_limit_bytes=...) here.
    out = pl.pallas_call(
        kernel,
        out_shape=jax.ShapeDtypeStruct((E, Cs, B), out_dtype),
        grid=(grid_m, E),
        in_specs=[
            pl.BlockSpec((tm, F), lambda i, e: (i, 0)),          # x (per batch tile)
            pl.BlockSpec((F, H), lambda i, e: (0, 0)),           # w1 (VMEM resident)
            pl.BlockSpec((None, 1, H), lambda i, e: (e, 0, 0)),  # per-env bias
            pl.BlockSpec((Cs, H), lambda i, e: (0, 0)),          # w2^T (resident)
            pl.BlockSpec((Cs, 1), lambda i, e: (0, 0)),          # b2 column (resident)
            pl.BlockSpec(memory_space=pltpu.MemorySpace.SMEM),   # 1/temp per env
        ],
        out_specs=pl.BlockSpec((None, Cs, tm), lambda i, e: (e, 0, i)),
        compiler_params=pltpu.CompilerParams(
            dimension_semantics=("parallel", "parallel")),       # v7x: both TCs busy
    )(x, w1x, b1_sel, w2t, b2t, scales)

    if Cs != C:
        out = out[:, :C, :]   # at most 7 padded class rows; usually a no-op
    return out


def init_raw_params(key, in_features, bottleneck_dim, num_class):
    """Deterministic synthetic parameters (shapes follow the PyTorch module).

    Weights are stored pre-transposed relative to nn.Linear: (in, out).
    """
    k1, k2, k3, k4 = jax.random.split(key, 4)
    f1 = in_features + 1
    return {
        "w1": jax.random.normal(k1, (f1, bottleneck_dim), jnp.float32) * 0.02,
        "b1": jax.random.normal(k2, (bottleneck_dim,), jnp.float32) * 0.01,
        "w2": jax.random.normal(k3, (bottleneck_dim, num_class), jnp.float32) * 0.02,
        "b2": jax.random.normal(k4, (num_class,), jnp.float32) * 0.01,
    }


def _reference_forward(x, env, raw, temp=1.0):
    B = x.shape[0]
    env_col = jnp.zeros((B, 1), x.dtype) if env == "src" else jnp.ones((B, 1), x.dtype)
    x1 = jnp.concatenate([x, env_col], axis=1)
    h = jnp.maximum(x1 @ raw["w1"] + raw["b1"], 0.0)
    return (h @ raw["w2"] + raw["b2"]) / temp


if __name__ == "__main__":
    batch_size = 8
    num_class = 8
    in_features = 31          # +1 env column = 32 (matches module's in_features+1)
    bottleneck_dim = 128

    key = jax.random.PRNGKey(0)
    kx, kp = jax.random.split(key)
    x = jax.random.normal(kx, (batch_size, in_features), jnp.float32)
    raw = init_raw_params(kp, in_features, bottleneck_dim, num_class)

    ref_src = _reference_forward(x, "src", raw, temp=1.0)
    ref_tgt = _reference_forward(x, "tgt", raw, temp=2.0)

    # --- f32 compute path (exact): both envs fused into ONE pallas_call ---
    params_f32 = prepare_params(raw, compute_dtype=jnp.float32)
    out_f32 = jax.block_until_ready(
        env_predictor_forward(x, params_f32, envs=("src", "tgt"), temps=(1.0, 2.0)))
    assert out_f32.shape == (2, num_class, batch_size)
    assert jnp.allclose(out_f32[0], ref_src.T, atol=1e-5, rtol=1e-5)
    assert jnp.allclose(out_f32[1], ref_tgt.T, atol=1e-5, rtol=1e-5)

    # --- multi-tile batch path (grid_m > 1, weights stay VMEM resident) ---
    B2 = 512
    x2 = jax.random.normal(jax.random.PRNGKey(3), (B2, in_features), jnp.float32)
    out_big = jax.block_until_ready(
        env_predictor_forward(x2, params_f32, envs=("src",), temps=(1.0,),
                              block_m=256))
    assert out_big.shape == (1, num_class, B2)
    assert jnp.allclose(out_big[0], _reference_forward(x2, "src", raw).T,
                        atol=1e-5, rtol=1e-5)

    # --- bf16 MXU path (v6e/v7x recommendation), relaxed tolerance ---
    params_bf16 = prepare_params(raw, compute_dtype=jnp.bfloat16)
    out_bf16 = jax.block_until_ready(
        env_predictor_forward(x, params_bf16, envs=("src", "tgt"), temps=(1.0, 2.0)))
    assert jnp.allclose(out_bf16[0], ref_src.T, atol=2e-2, rtol=2e-2)
    assert jnp.allclose(out_bf16[1], ref_tgt.T, atol=2e-2, rtol=2e-2)

    print("KERNEL_OK")
</pallas_src>

<mosaic_0001>
module attributes {stable_mosaic.version = 11 : i64} {
  func.func @_env_predictor_kernel(%arg0: i32, %arg1: i32, %arg2: memref<8x31xf32, #tpu.memory_space<vmem>>, %arg3: memref<31x128xf32, #tpu.memory_space<vmem>>, %arg4: memref<1x1x128xf32, #tpu.memory_space<vmem>>, %arg5: memref<8x128xf32, #tpu.memory_space<vmem>>, %arg6: memref<8x1xf32, #tpu.memory_space<vmem>>, %arg7: memref<2xf32, #tpu.memory_space<smem>>, %arg8: memref<1x8x8xf32, #tpu.memory_space<vmem>>) attributes {dimension_semantics = [#tpu.dimension_semantics<parallel>, #tpu.dimension_semantics<parallel>], iteration_bounds = array<i64: 1, 2>, scalar_prefetch = 0 : i64, scratch_operands = 0 : i64, tpu.core_type = #tpu.core_type<tc>, window_params = [{transform_indices = @transform_0, window_bounds = array<i64: 8, 31>}, {pipeline_mode = #tpu.pipeline_mode<synchronous>, transform_indices = @transform_1, window_bounds = array<i64: 31, 128>}, {transform_indices = @transform_2, window_bounds = array<i64: 1, 1, 128>}, {pipeline_mode = #tpu.pipeline_mode<synchronous>, transform_indices = @transform_3, window_bounds = array<i64: 8, 128>}, {pipeline_mode = #tpu.pipeline_mode<synchronous>, transform_indices = @transform_4, window_bounds = array<i64: 8, 1>}, {transform_indices = @transform_5, window_bounds = array<i64: 2>}, {transform_indices = @transform_6, window_bounds = array<i64: 1, 8, 8>}]} {
    %c0 = arith.constant 0 : index
    %c0_0 = arith.constant 0 : index
    %0 = vector.load %arg2[%c0, %c0_0] : memref<8x31xf32, #tpu.memory_space<vmem>>, vector<8x31xf32>
    %c0_1 = arith.constant 0 : index
    %c0_2 = arith.constant 0 : index
    %1 = vector.load %arg3[%c0_1, %c0_2] : memref<31x128xf32, #tpu.memory_space<vmem>>, vector<31x128xf32>
    %cst = arith.constant dense<0.000000e+00> : vector<8x128xf32>
    %2 = tpu.matmul %0, %1, %cst {dimension_numbers = #tpu.dot_dimension_numbers<[1], [0], [0], [1], [0, 0, 1, 1], [], []>} : vector<8x31xf32>, vector<31x128xf32>, vector<8x128xf32> -> vector<8x128xf32>
    %c0_3 = arith.constant 0 : index
    %c0_4 = arith.constant 0 : index
    %c0_5 = arith.constant 0 : index
    %3 = vector.load %arg4[%c0_3, %c0_4, %c0_5] : memref<1x1x128xf32, #tpu.memory_space<vmem>>, vector<1x1x128xf32>
    %4 = vector.shape_cast %3 : vector<1x1x128xf32> to vector<1x128xf32>
    %5 = vector.broadcast %4 : vector<1x128xf32> to vector<8x128xf32>
    %6 = arith.addf %2, %5 : vector<8x128xf32>
    %cst_6 = arith.constant 0.000000e+00 : f32
    %7 = vector.broadcast %cst_6 : f32 to vector<8x128xf32>
    %8 = arith.maximumf %6, %7 : vector<8x128xf32>
    %c0_7 = arith.constant 0 : index
    %c0_8 = arith.constant 0 : index
    %9 = vector.load %arg5[%c0_7, %c0_8] : memref<8x128xf32, #tpu.memory_space<vmem>>, vector<8x128xf32>
    %cst_9 = arith.constant dense<0.000000e+00> : vector<8x8xf32>
    %10 = tpu.matmul %9, %8, %cst_9 {dimension_numbers = #tpu.dot_dimension_numbers<[1], [1], [0], [0], [0, 0, 1, 0], [], []>} : vector<8x128xf32>, vector<8x128xf32>, vector<8x8xf32> -> vector<8x8xf32>
    %c0_10 = arith.constant 0 : index
    %c0_11 = arith.constant 0 : index
    %11 = vector.load %arg6[%c0_10, %c0_11] : memref<8x1xf32, #tpu.memory_space<vmem>>, vector<8x1xf32>
    %12 = vector.broadcast %11 : vector<8x1xf32> to vector<8x8xf32>
    %13 = arith.addf %10, %12 : vector<8x8xf32>
    %14 = arith.index_cast %arg1 : i32 to index
    %15 = memref.load %arg7[%14] : memref<2xf32, #tpu.memory_space<smem>>
    %16 = vector.broadcast %15 : f32 to vector<8x8xf32>
    %17 = arith.mulf %13, %16 : vector<8x8xf32>
    %c0_12 = arith.constant 0 : index
    %c0_13 = arith.constant 0 : index
    %c0_14 = arith.constant 0 : index
    %18 = vector.load %arg8[%c0_12, %c0_13, %c0_14] : memref<1x8x8xf32, #tpu.memory_space<vmem>>, vector<1x8x8xf32>
    %19 = vector.shape_cast %18 : vector<1x8x8xf32> to vector<8x8xf32>
    %20 = vector.shape_cast %17 : vector<8x8xf32> to vector<1x8x8xf32>
    tpu.vector_store %arg8[%c0_12, %c0_13, %c0_14], %20 {strides = array<i32>} : memref<1x8x8xf32, #tpu.memory_space<vmem>>, vector<1x8x8xf32>,
    return
  }
  func.func @transform_0(%arg0: i32, %arg1: i32) -> (i32, i32) {
    %c0_i32 = arith.constant 0 : i32
    %c0_i32_0 = arith.constant 0 : i32
    return %arg0, %c0_i32 : i32, i32
  }
  func.func @transform_1(%arg0: i32, %arg1: i32) -> (i32, i32) {
    %c0_i32 = arith.constant 0 : i32
    %c0_i32_0 = arith.constant 0 : i32
    %c0_i32_1 = arith.constant 0 : i32
    return %c0_i32, %c0_i32_0 : i32, i32
  }
  func.func @transform_2(%arg0: i32, %arg1: i32) -> (i32, i32, i32) {
    %c0_i32 = arith.constant 0 : i32
    %c0_i32_0 = arith.constant 0 : i32
    %c0_i32_1 = arith.constant 0 : i32
    return %arg1, %c0_i32, %c0_i32_0 : i32, i32, i32
  }
  func.func @transform_3(%arg0: i32, %arg1: i32) -> (i32, i32) {
    %c0_i32 = arith.constant 0 : i32
    %c0_i32_0 = arith.constant 0 : i32
    %c0_i32_1 = arith.constant 0 : i32
    return %c0_i32, %c0_i32_0 : i32, i32
  }
  func.func @transform_4(%arg0: i32, %arg1: i32) -> (i32, i32) {
    %c0_i32 = arith.constant 0 : i32
    %c0_i32_0 = arith.constant 0 : i32
    %c0_i32_1 = arith.constant 0 : i32
    return %c0_i32, %c0_i32_0 : i32, i32
  }
  func.func @transform_5(%arg0: i32, %arg1: i32) -> i32 {
    %c0_i32 = arith.constant 0 : i32
    %c0_i32_0 = arith.constant 0 : i32
    return %c0_i32 : i32
  }
  func.func @transform_6(%arg0: i32, %arg1: i32) -> (i32, i32, i32) {
    %c0_i32 = arith.constant 0 : i32
    %c0_i32_0 = arith.constant 0 : i32
    return %arg1, %c0_i32, %arg0 : i32, i32, i32
  }
}

</mosaic_0001>

<llo_original>
// kernel: tpu_custom_call.1
$region0: #{tpu_custom_call.1}
  #allocation0 [shape = 'u32[]', space=smem, size = 0x4, offset = 0x4, fixed_abs, tag = 'smem constant byte address 0x4 - core index']
  #allocation1 [shape = 'u32[144,128]{1,0:T(1,128)}', space=vmem, size = 0x12000, scoped, tag = 'internal scratch']
  %s0 = inlined_call_operand.vmem [shape: f32[8,31], index: 0, kind: input, shape index: {}]
  %s1 = inlined_call_operand.hbm [shape: f32[31,128], index: 1, kind: input, shape index: {}]
  %s2 = inlined_call_operand.hbm [shape: f32[2,1,128], index: 2, kind: input, shape index: {}]
  %s3 = inlined_call_operand.vmem [shape: f32[8,128], index: 3, kind: input, shape index: {}]
  %s4 = inlined_call_operand.vmem [shape: f32[8,1], index: 4, kind: input, shape index: {}]
  %s5 = inlined_call_operand.vmem [shape: f32[2], index: 5, kind: input, shape index: {}]
  %s6 = inlined_call_operand.hbm [shape: f32[2,8,8], index: 6, kind: output, shape index: {}]
  %s7 = sld [smem:[#allocation0]]
  $region69: #{tpu_custom_call.1} parent=0
    _
  %s9 = ssub.s32 1, %s7
  %s10 = scalar_select 0, %s9, %s7
  $region1: #{tpu_custom_call.1} parent=0
    #allocation2 [shape = 'u8[16384]{0}', space=vmem, size = 0x4000, scoped, tag = 'input window, operand 1, single buffered']
    #allocation3 [shape = 's32[2]{0}', space=sflag, size = 0x8, scoped, tag = 'scoped memory for tpu_custom_call.1']
    #allocation4 [shape = 's32[2]{0}', space=sflag, size = 0x8, scoped, tag = 'scoped memory for tpu_custom_call.1']
    #allocation5 [shape = 's32[2]{0}', space=sflag, size = 0x8, scoped, tag = 'scoped memory for tpu_custom_call.1']
    #allocation6 [shape = 'u8[1024]{0}', space=vmem, size = 0x400, scoped, tag = 'input window, operand 2']
    #allocation7 [shape = 's32[2]{0}', space=sflag, size = 0x8, scoped, tag = 'scoped memory for tpu_custom_call.1']
    #allocation8 [shape = 'u8[512]{0}', space=smem, size = 0x200, scoped, tag = 'input window, operand 5, single buffered']
    #allocation9 [shape = 'u8[8192]{0}', space=vmem, size = 0x2000, scoped, tag = 'output window, operand 0']
    %11 = vsyncpa [#allocation3], 0
    %12 = vsyncpa [#allocation7], 0
    %s13 = scalar_lea.sflag [#allocation7], 1
    %14 = vsyncpa %s13, 0
    %15 = vsyncpa [#allocation5], 0
    %16 = vsyncpa [#allocation4], 0
    %s17 = scalar_lea.sflag [#allocation4], 1
    %18 = vsyncpa %s17, 0
    loop: start=0, step=1, limit=4
    $region2: #{tpu_custom_call.1} parent=1 // loop_pre_header
      _
    $region3: #{tpu_custom_call.1} parent=1 // loop_header
      %s20 = sphi 0, %s24
      %p21 = scmp.ge.s32.totalorder %s20, 4
      %s27 = sphi 0, %s39
      %s28 = sphi 0, %s35
      %s29 = sphi 0, %s27
      %s30 = sphi 0, %s28
      %s31 = sphi 0, %s29
      %s32 = sphi 0, %s30
      %s42 = sphi 0, %s44
      %s45 = sphi 0, %s42
      %s46 = sphi 0, %s45
      %s62 = sphi 0, %s46
      %s66 = sphi 0, %s66
      %s68 = sphi 0, %s66
      %s69 = sphi 0, %s68
      %s83 = sphi 0, %s69
      %s89 = sphi 0, %s91
      %s92 = sphi 0, %s89
      %s93 = sphi 0, %s92
      %s109 = sphi 0, %s93
      %s113 = sphi 0, %s113
      %s115 = sphi 0, %s113
      %s116 = sphi 0, %s115
      %s130 = sphi 0, %s116
      %s134 = sphi 0, %s134
      %s136 = sphi 0, %s134
      %s137 = sphi 0, %s136
      %s151 = sphi 0, %s137
      %s155 = sphi 0, %s155
      %s157 = sphi 0, %s155
      %s158 = sphi 0, %s157
      %s172 = sphi 0, %s158
      %s180 = sphi 0, %s182
      %s183 = sphi 0, %s180
      %s184 = sphi 0, %s183
      %s200 = sphi 0, %s184
    $region4: #{tpu_custom_call.1} parent=1 // loop_header_branch
      %23 = sbr.rel (%p21) target = $region8
    $region5: #{tpu_custom_call.1} parent=1 // loop_body
      %s25 = ssub.s32 %s20, 1
      %s26 = ssub.s32 %s20, 2
      %s33 = sadd.s32 1, %s28
      %p34 = scmp.ge.s32.totalorder %s33, 2
      %s35 = scalar_select %p34, 0, %s33
      %s36 = sadd.s32 1, %s27
      %s37 = scalar_select %p34, %s36, %s27
      %p38 = scmp.ge.s32.totalorder %s37, 1
      %s39 = scalar_select %p38, 0, %s37
      %s40 = ssub.s32 %s27, %s39
      %p41 = scmp.eq.s32.totalorder %s40, 0
      %s43 = sadd.s32 %s42, 1
      %s44 = scalar_select %p41, %s42, %s43
      %p47 = pneg %p41
      %p48 = scmp.eq.s32.totalorder %s20, 1
      %p49 = por %p47, %p48
      %p50 = scmp.ne.s32.totalorder %s42, %s45
      %p51 = scmp.eq.s32.totalorder %s20, 0
      %p52 = por %p50, %p51
      %p53 = scmp.ne.s32.totalorder %s42, %s45
      %p54 = scmp.eq.s32.totalorder %s25, 1
      %p55 = por %p53, %p54
      %p56 = scmp.ne.s32.totalorder %s45, %s46
      %p57 = scmp.eq.s32.totalorder %s25, 0
      %p58 = por %p56, %p57
      %p59 = scmp.ne.s32.totalorder %s45, %s46
      %p60 = scmp.eq.s32.totalorder %s26, 1
      %p61 = por %p59, %p60
      %p63 = scmp.ne.s32.totalorder %s46, %s62
      %p64 = scmp.eq.s32.totalorder %s26, 0
      %p65 = por %p63, %p64
      %s67 = sadd.s32 %s66, 1
      %p70 = scmp.eq.s32.totalorder %s20, 1
      %p71 = scmp.ne.s32.totalorder %s66, %s68
      %p72 = scmp.eq.s32.totalorder %s20, 0
      %p73 = por %p71, %p72
      %p74 = scmp.ne.s32.totalorder %s66, %s68
      %p75 = scmp.eq.s32.totalorder %s25, 1
      %p76 = por %p74, %p75
      %p77 = scmp.ne.s32.totalorder %s68, %s69
      %p78 = scmp.eq.s32.totalorder %s25, 0
      %p79 = por %p77, %p78
      %p80 = scmp.ne.s32.totalorder %s68, %s69
      %p81 = scmp.eq.s32.totalorder %s26, 1
      %p82 = por %p80, %p81
      %p84 = scmp.ne.s32.totalorder %s69, %s83
      %p85 = scmp.eq.s32.totalorder %s26, 0
      %p86 = por %p84, %p85
      %s87 = ssub.s32 %s28, %s35
      %p88 = scmp.eq.s32.totalorder %s87, 0
      %s90 = sadd.s32 %s89, 1
      %s91 = scalar_select %p88, %s89, %s90
      %p94 = pneg %p88
      %p95 = scmp.eq.s32.totalorder %s20, 1
      %p96 = por %p94, %p95
      %p97 = scmp.ne.s32.totalorder %s89, %s92
      %p98 = scmp.eq.s32.totalorder %s20, 0
      %p99 = por %p97, %p98
      %p100 = scmp.ne.s32.totalorder %s89, %s92
      %p101 = scmp.eq.s32.totalorder %s25, 1
      %p102 = por %p100, %p101
      %p103 = scmp.ne.s32.totalorder %s92, %s93
      %p104 = scmp.eq.s32.totalorder %s25, 0
      %p105 = por %p103, %p104
      %p106 = scmp.ne.s32.totalorder %s92, %s93
      %p107 = scmp.eq.s32.totalorder %s26, 1
      %p108 = por %p106, %p107
      %p110 = scmp.ne.s32.totalorder %s93, %s109
      %p111 = scmp.eq.s32.totalorder %s26, 0
      %p112 = por %p110, %p111
      %s114 = sadd.s32 %s113, 1
      %p117 = scmp.eq.s32.totalorder %s20, 1
      %p118 = scmp.ne.s32.totalorder %s113, %s115
      %p119 = scmp.eq.s32.totalorder %s20, 0
      %p120 = por %p118, %p119
      %p121 = scmp.ne.s32.totalorder %s113, %s115
      %p122 = scmp.eq.s32.totalorder %s25, 1
      %p123 = por %p121, %p122
      %p124 = scmp.ne.s32.totalorder %s115, %s116
      %p125 = scmp.eq.s32.totalorder %s25, 0
      %p126 = por %p124, %p125
      %p127 = scmp.ne.s32.totalorder %s115, %s116
      %p128 = scmp.eq.s32.totalorder %s26, 1
      %p129 = por %p127, %p128
      %p131 = scmp.ne.s32.totalorder %s116, %s130
      %p132 = scmp.eq.s32.totalorder %s26, 0
      %p133 = por %p131, %p132
      %s135 = sadd.s32 %s134, 1
      %p138 = scmp.eq.s32.totalorder %s20, 1
      %p139 = scmp.ne.s32.totalorder %s134, %s136
      %p140 = scmp.eq.s32.totalorder %s20, 0
      %p141 = por %p139, %p140
      %p142 = scmp.ne.s32.totalorder %s134, %s136
      %p143 = scmp.eq.s32.totalorder %s25, 1
      %p144 = por %p142, %p143
      %p145 = scmp.ne.s32.totalorder %s136, %s137
      %p146 = scmp.eq.s32.totalorder %s25, 0
      %p147 = por %p145, %p146
      %p148 = scmp.ne.s32.totalorder %s136, %s137
      %p149 = scmp.eq.s32.totalorder %s26, 1
      %p150 = por %p148, %p149
      %p152 = scmp.ne.s32.totalorder %s137, %s151
      %p153 = scmp.eq.s32.totalorder %s26, 0
      %p154 = por %p152, %p153
      %s156 = sadd.s32 %s155, 1
      %p159 = scmp.eq.s32.totalorder %s20, 1
      %p160 = scmp.ne.s32.totalorder %s155, %s157
      %p161 = scmp.eq.s32.totalorder %s20, 0
      %p162 = por %p160, %p161
      %p163 = scmp.ne.s32.totalorder %s155, %s157
      %p164 = scmp.eq.s32.totalorder %s25, 1
      %p165 = por %p163, %p164
      %p166 = scmp.ne.s32.totalorder %s157, %s158
      %p167 = scmp.eq.s32.totalorder %s25, 0
      %p168 = por %p166, %p167
      %p169 = scmp.ne.s32.totalorder %s157, %s158
      %p170 = scmp.eq.s32.totalorder %s26, 1
      %p171 = por %p169, %p170
      %p173 = scmp.ne.s32.totalorder %s158, %s172
      %p174 = scmp.eq.s32.totalorder %s26, 0
      %p175 = por %p173, %p174
      %s176 = ssub.s32 %s28, %s35
      %s177 = ssub.s32 %s27, %s39
      %s178 = sor.u32 %s176, %s177
      %p179 = scmp.eq.s32.totalorder %s178, 0
      %s181 = sadd.s32 %s180, 1
      %s182 = scalar_select %p179, %s180, %s181
      %p185 = pneg %p179
      %p186 = scmp.eq.s32.totalorder %s20, 1
      %p187 = por %p185, %p186
      %p188 = scmp.ne.s32.totalorder %s180, %s183
      %p189 = scmp.eq.s32.totalorder %s20, 0
      %p190 = por %p188, %p189
      %p191 = scmp.ne.s32.totalorder %s180, %s183
      %p192 = scmp.eq.s32.totalorder %s25, 1
      %p193 = por %p191, %p192
      %p194 = scmp.ne.s32.totalorder %s183, %s184
      %p195 = scmp.eq.s32.totalorder %s25, 0
      %p196 = por %p194, %p195
      %p197 = scmp.ne.s32.totalorder %s183, %s184
      %p198 = scmp.eq.s32.totalorder %s26, 1
      %p199 = por %p197, %p198
      %p201 = scmp.ne.s32.totalorder %s184, %s200
      %p202 = scmp.eq.s32.totalorder %s26, 0
      %p203 = por %p201, %p202
      %p204 = scmp.le.s32.totalorder 1, %s20
      %p205 = scmp.lt.s32.totalorder %s20, 3
      %p206 = pnand %p204, %p205
      %p207 = pneg %p206
      // Predicated region
      $region9: #{tpu_custom_call.1} parent=5 // pred_check
        _
      $region10: #{tpu_custom_call.1} parent=5 // pred_check_branch
        %209 = sbr.rel (%p206) target = $region12
      $region11: #{tpu_custom_call.1} parent=5 // pred_region
        %s210 = ssub.s32 %s20, 1
        // Predicated region
        $region13: #{tpu_custom_call.1} parent=11 // pred_check
          %p211 = pneg %p58
        $region14: #{tpu_custom_call.1} parent=11 // pred_check_branch
          %213 = sbr.rel (%p211) target = $region16
        $region15: #{tpu_custom_call.1} parent=11 // pred_region
          %p214 = scmp.lt.s32.totalorder %s29, 0
          %s215 = scalar_select %p214, %s29, 0
          %s216 = smul.addr %s215, 8
          %s217 = scalar_lea.vmem %s0, %s216
        $region16: #{tpu_custom_call.1} parent=11 // pred_fallthru
          _
        // Predicated region
        $region17: #{tpu_custom_call.1} parent=11 // pred_check
          %p218 = pneg %p79
        $region18: #{tpu_custom_call.1} parent=11 // pred_check_branch
          %220 = sbr.rel (%p218) target = $region20
        $region19: #{tpu_custom_call.1} parent=11 // pred_region
          %s222 = ssub.s32 512, 512
          %223 = vsyncadd [#allocation3], %s222
          %s224 = sshll.u32 [#allocation2], 4
          %s225 = int_to_ptr.vmem [resolvable:$true] %s224
          %230 = dma.hbm_to_vmem [thread:$0]  %s1, 512, %s225, [#allocation3], 128, 128, 8
        $region20: #{tpu_custom_call.1} parent=11 // pred_fallthru
          _
        // Predicated region
        $region21: #{tpu_custom_call.1} parent=11 // pred_check
          %p231 = pneg %p126
        $region22: #{tpu_custom_call.1} parent=11 // pred_check_branch
          %233 = sbr.rel (%p231) target = $region24
        $region23: #{tpu_custom_call.1} parent=11 // pred_region
          _
        $region24: #{tpu_custom_call.1} parent=11 // pred_fallthru
          _
        // Predicated region
        $region25: #{tpu_custom_call.1} parent=11 // pred_check
          %p234 = pneg %p147
        $region26: #{tpu_custom_call.1} parent=11 // pred_check_branch
          %236 = sbr.rel (%p234) target = $region28
        $region27: #{tpu_custom_call.1} parent=11 // pred_region
          _
        $region28: #{tpu_custom_call.1} parent=11 // pred_fallthru
          _
        // Predicated region
        $region29: #{tpu_custom_call.1} parent=11 // pred_check
          %p237 = pneg %p168
        $region30: #{tpu_custom_call.1} parent=11 // pred_check_branch
          %239 = sbr.rel (%p237) target = $region32
        $region31: #{tpu_custom_call.1} parent=11 // pred_region
          %s241 = ssub.s32 16, 16
          %242 = vsyncadd [#allocation5], %s241
          %s244 = sshll.u32 %s5, 4
          %s245 = int_to_ptr.vmem [resolvable:$true] %s244
          %247 = dma.vmem_to_smem %s245, 16, [#allocation8], [#allocation5]
        $region32: #{tpu_custom_call.1} parent=11 // pred_fallthru
          _
      $region12: #{tpu_custom_call.1} parent=5 // pred_fallthru
        _
      %p248 = scmp.lt.s32.totalorder %s20, 2
      // Predicated region
      $region33: #{tpu_custom_call.1} parent=5 // pred_check
        %p249 = pneg %p248
      $region34: #{tpu_custom_call.1} parent=5 // pred_check_branch
        %251 = sbr.rel (%p249) target = $region36
      $region35: #{tpu_custom_call.1} parent=5 // pred_region
        // Predicated region
        $region37: #{tpu_custom_call.1} parent=35 // pred_check
          %p252 = pneg %p99
        $region38: #{tpu_custom_call.1} parent=35 // pred_check_branch
          %254 = sbr.rel (%p252) target = $region40
        $region39: #{tpu_custom_call.1} parent=35 // pred_region
          %s255 = sand.u32 %s89, 1
          %s256 = scalar_lea.sflag [#allocation7], %s255
          %s257 = sand.u32 %s89, 1
          %s258 = scalar_lea.vmem [#allocation6], %s257
          %s260 = ssub.s32 16, 16
          %261 = vsyncadd %s256, %s260
          %s262 = smul.addr %s28, 16
          %s263 = scalar_lea.hbm %s2, %s262
          %s265 = sshll.u32 %s258, 4
          %s266 = int_to_ptr.vmem [resolvable:$true] %s265
          %268 = dma.hbm_to_vmem [thread:$0]  %s263, 16, %s266, %s256
        $region40: #{tpu_custom_call.1} parent=35 // pred_fallthru
          _
      $region36: #{tpu_custom_call.1} parent=5 // pred_fallthru
        _
      %p269 = scmp.le.s32.totalorder 1, %s20
      %p270 = scmp.lt.s32.totalorder %s20, 3
      %p271 = pnand %p269, %p270
      %p272 = pneg %p271
      // Predicated region
      $region41: #{tpu_custom_call.1} parent=5 // pred_check
        _
      $region42: #{tpu_custom_call.1} parent=5 // pred_check_branch
        %274 = sbr.rel (%p271) target = $region44
      $region43: #{tpu_custom_call.1} parent=5 // pred_region
        %s275 = ssub.s32 %s20, 1
        // Predicated region
        $region45: #{tpu_custom_call.1} parent=43 // pred_check
          %p276 = pneg %p79
        $region46: #{tpu_custom_call.1} parent=43 // pred_check_branch
          %278 = sbr.rel (%p276) target = $region48
        $region47: #{tpu_custom_call.1} parent=43 // pred_region
          %279 = dma.done [#allocation3], 512
        $region48: #{tpu_custom_call.1} parent=43 // pred_fallthru
          _
        %s280 = sand.u32 %s92, 1
        %s281 = scalar_lea.sflag [#allocation7], %s280
        %s282 = sand.u32 %s92, 1
        %s283 = scalar_lea.vmem [#allocation6], %s282
        // Predicated region
        $region49: #{tpu_custom_call.1} parent=43 // pred_check
          %p284 = pneg %p105
        $region50: #{tpu_custom_call.1} parent=43 // pred_check_branch
          %286 = sbr.rel (%p284) target = $region52
        $region51: #{tpu_custom_call.1} parent=43 // pred_region
          %287 = dma.done %s281, 16
        $region52: #{tpu_custom_call.1} parent=43 // pred_fallthru
          _
        // Predicated region
        $region53: #{tpu_custom_call.1} parent=43 // pred_check
          %p288 = pneg %p168
        $region54: #{tpu_custom_call.1} parent=43 // pred_check_branch
          %290 = sbr.rel (%p288) target = $region56
        $region55: #{tpu_custom_call.1} parent=43 // pred_region
          %291 = dma.done [#allocation5], 16
        $region56: #{tpu_custom_call.1} parent=43 // pred_fallthru
          _
        %292 = sfence
        %p293 = scmp.lt.s32.totalorder %s29, 0
        %s294 = scalar_select %p293, %s29, 0
        %s295 = smul.addr %s294, 8
        %s296 = scalar_lea.vmem %s0, %s295
        %p297 = pneg %p58
        %p298 = pneg %p55
        %p299 = pneg %p79
        %p300 = pneg %p76
        %s301 = sand.u32 %s92, 1
        %s302 = scalar_lea.sflag [#allocation7], %s301
        %s303 = sand.u32 %s92, 1
        %s304 = scalar_lea.vmem [#allocation6], %s303
        %p305 = pneg %p105
        %p306 = pneg %p102
        %p307 = pneg %p126
        %p308 = pneg %p123
        %p309 = pneg %p147
        %p310 = pneg %p144
        %p311 = pneg %p168
        %p312 = pneg %p165
        %p313 = pneg %p196
        %p314 = pneg %p193
        %s315 = sand.u32 %s183, 1
        %s316 = scalar_lea.sflag [#allocation4], %s315
        %s317 = sand.u32 %s183, 1
        %s318 = smul.addr %s317, 8
        %s319 = scalar_lea.vmem [#allocation9], %s318
        %p320 = scmp.lt.s32.totalorder %s29, 0
        %s321 = scalar_select %p320, %s29, 0
        %s322 = smul.addr %s321, 8
        %s323 = scalar_lea.vmem %s0, %s322
        %v324 = vld [vmem:[%s323] sm:$0xff]
        %v325 = vld [vmem:[#allocation2] sm:$0xff]
        %v326 = vld [vmem:[#allocation2 + $0x8] sm:$0xff]
        %v327 = vld [vmem:[#allocation2 + $0x10] sm:$0xff]
        %v328 = vld [vmem:[#allocation2 + $0x18] sm:$0x7f]
        %v329 = vld [vmem:[%s283] sm:$0x1]
        %v331 = vlaneseq
        %v332 = vshrl.u32 %v331, 7
        %v333 = vsub.s32 0, %v332
        %v334 = vrot.slane %v329, %v333
        %vm336 = vcmask 252928
        %v338 = vsel %vm336, %v324, 0
        %vm340 = vcmask 1046528
        %v342 = vsel %vm340, %v328, 0
        %344 = vmatprep.subr.mxu0 0.0
        %345 = vmatpush1.msra.mxu0 %v325
        %346 = vmatprep.subr.mxu0 0.0
        %347 = vmatpush1.msra.mxu0 %v326
        %348 = vmatprep.subr.mxu0 0.0
        %349 = vmatpush1.msra.mxu0 %v327
        %350 = vmatprep.subr.mxu0 0.0
        %351 = vmatpush1.msra.mxu0 %v342
        %352 = vmatprep.subr.mxu0 0.0
        %353 = vmatpush1.msra.mxu0 0.0
        %354 = vmatprep.subr.mxu0 0.0
        %355 = vmatpush1.msra.mxu0 0.0
        %356 = vmatprep.subr.mxu0 0.0
        %357 = vmatpush1.msra.mxu0 0.0
        %358 = vmatprep.subr.mxu0 0.0
        %359 = vmatpush1.msra.mxu0 0.0
        %360 = vmatprep.subr.mxu0 0.0
        %361 = vmatpush1.msra.mxu0 0.0
        %362 = vmatprep.subr.mxu0 0.0
        %363 = vmatpush1.msra.mxu0 0.0
        %364 = vmatprep.subr.mxu0 0.0
        %365 = vmatpush1.msra.mxu0 0.0
        %366 = vmatprep.subr.mxu0 0.0
        %367 = vmatpush1.msra.mxu0 0.0
        %368 = vmatprep.subr.mxu0 0.0
        %369 = vmatpush1.msra.mxu0 0.0
        %370 = vmatprep.subr.mxu0 0.0
        %371 = vmatpush1.msra.mxu0 0.0
        %372 = vmatprep.subr.mxu0 0.0
        %373 = vmatpush1.msra.mxu0 0.0
        %374 = vmatprep.subr.mxu0 0.0
        %375 = vmatpush1.msra.mxu0 0.0
        %376 = vmatprep.subr.mxu0 0.0
        %377 = vmatpush1.msra.mxu0 0.0
        %378 = vmatprep.subr.mxu0 0.0
        %379 = vmatpush1.msra.mxu0 0.0
        %380 = vmatprep.subr.mxu0 0.0
        %381 = vmatpush1.msra.mxu0 0.0
        %382 = vmatprep.subr.mxu0 0.0
        %383 = vmatpush1.msra.mxu0 0.0
        %384 = vmatprep.subr.mxu0 0.0
        %385 = vmatpush1.msra.mxu0 0.0
        %386 = vmatprep.subr.mxu0 0.0
        %387 = vmatpush1.msra.mxu0 0.0
        %388 = vmatprep.subr.mxu0 0.0
        %389 = vmatpush1.msra.mxu0 0.0
        %390 = vmatprep.subr.mxu0 0.0
        %391 = vmatpush1.msra.mxu0 0.0
        %392 = vmatprep.subr.mxu0 0.0
        %393 = vmatpush1.msra.mxu0 0.0
        %394 = vmatprep.subr.mxu0 0.0
        %395 = vmatpush1.msra.mxu0 0.0
        %396 = vmatprep.subr.mxu0 0.0
        %397 = vmatpush1.msra.mxu0 0.0
        %398 = vmatprep.subr.mxu0 0.0
        %399 = vmatpush1.msra.mxu0 0.0
        %400 = vmatprep.subr.mxu0 0.0
        %401 = vmatpush1.msra.mxu0 0.0
        %402 = vmatprep.subr.mxu0 0.0
        %403 = vmatpush1.msra.mxu0 0.0
        %404 = vmatprep.subr.mxu0 0.0
        %405 = vmatpush1.msra.mxu0 0.0
        %406 = vmatprep.subr.mxu0 0.0
        %407 = vmatpush1.msra.mxu0 0.0
        %408 = vmatprep.mubr.f32.mxu0 0.0
        %409 = vmatmul.mubr.f32.gmra.mrb[0].mxu0 %v338
        %v410 = vpop.f32.mrb[0].mxu0
        %v411 = vadd.f32 %v334, %v410
        %v412 = vpop.f32.mrb[0].mxu0
        %413 = vdwg.mxu0
        %v414 = vmax.f32 %v411, 0.0
        %v415 = vld [vmem:[%s3] sm:$0xff]
        %v416 = vld [vmem:[%s4] sm:$0xff]
        %418 = vset.pattern.permute.xlu0 0
        %419 = vperm.xlu0 %418, %v416
        %v420 = vpop.permute.xlu0 %419
        %422 = vmatprep.subr.mxu0 0.0
        %423 = vmatpush1.xpose.msra.mxu0 %v414
        %424 = vmatprep.subr.mxu0 0.0
        %425 = vmatpush1.xpose.msra.mxu0 0.0
        %426 = vmatprep.subr.mxu0 0.0
        %427 = vmatpush1.xpose.msra.mxu0 0.0
        %428 = vmatprep.subr.mxu0 0.0
        %429 = vmatpush1.xpose.msra.mxu0 0.0
        %430 = vmatprep.subr.mxu0 0.0
        %431 = vmatpush1.xpose.msra.mxu0 0.0
        %432 = vmatprep.subr.mxu0 0.0
        %433 = vmatpush1.xpose.msra.mxu0 0.0
        %434 = vmatprep.subr.mxu0 0.0
        %435 = vmatpush1.xpose.msra.mxu0 0.0
        %436 = vmatprep.subr.mxu0 0.0
        %437 = vmatpush1.xpose.msra.mxu0 0.0
        %438 = vmatprep.subr.mxu0 0.0
        %439 = vmatpush1.xpose.msra.mxu0 0.0
        %440 = vmatprep.subr.mxu0 0.0
        %441 = vmatpush1.xpose.msra.mxu0 0.0
        %442 = vmatprep.subr.mxu0 0.0
        %443 = vmatpush1.xpose.msra.mxu0 0.0
        %444 = vmatprep.subr.mxu0 0.0
        %445 = vmatpush1.xpose.msra.mxu0 0.0
        %446 = vmatprep.subr.mxu0 0.0
        %447 = vmatpush1.xpose.msra.mxu0 0.0
        %448 = vmatprep.subr.mxu0 0.0
        %449 = vmatpush1.xpose.msra.mxu0 0.0
        %450 = vmatprep.subr.mxu0 0.0
        %451 = vmatpush1.xpose.msra.mxu0 0.0
        %452 = vmatprep.subr.mxu0 0.0
        %453 = vmatpush1.xpose.msra.mxu0 0.0
        %454 = vmatprep.subr.mxu0 0.0
        %455 = vmatpush1.xpose.msra.mxu0 0.0
        %456 = vmatprep.subr.mxu0 0.0
        %457 = vmatpush1.xpose.msra.mxu0 0.0
        %458 = vmatprep.subr.mxu0 0.0
        %459 = vmatpush1.xpose.msra.mxu0 0.0
        %460 = vmatprep.subr.mxu0 0.0
        %461 = vmatpush1.xpose.msra.mxu0 0.0
        %462 = vmatprep.subr.mxu0 0.0
        %463 = vmatpush1.xpose.msra.mxu0 0.0
        %464 = vmatprep.subr.mxu0 0.0
        %465 = vmatpush1.xpose.msra.mxu0 0.0
        %466 = vmatprep.subr.mxu0 0.0
        %467 = vmatpush1.xpose.msra.mxu0 0.0
        %468 = vmatprep.subr.mxu0 0.0
        %469 = vmatpush1.xpose.msra.mxu0 0.0
        %470 = vmatprep.subr.mxu0 0.0
        %471 = vmatpush1.xpose.msra.mxu0 0.0
        %472 = vmatprep.subr.mxu0 0.0
        %473 = vmatpush1.xpose.msra.mxu0 0.0
        %474 = vmatprep.subr.mxu0 0.0
        %475 = vmatpush1.xpose.msra.mxu0 0.0
        %476 = vmatprep.subr.mxu0 0.0
        %477 = vmatpush1.xpose.msra.mxu0 0.0
        %478 = vmatprep.subr.mxu0 0.0
        %479 = vmatpush1.xpose.msra.mxu0 0.0
        %480 = vmatprep.subr.mxu0 0.0
        %481 = vmatpush1.xpose.msra.mxu0 0.0
        %482 = vmatprep.subr.mxu0 0.0
        %483 = vmatpush1.xpose.msra.mxu0 0.0
        %484 = vmatprep.subr.mxu0 0.0
        %485 = vmatpush1.xpose.msra.mxu0 0.0
        %486 = vmatprep.mubr.f32.mxu0 0.0
        %487 = vmatmul.mubr.f32.gmra.mrb[0].mxu0 %v415
        %v488 = vpop.f32.mrb[0].mxu0
        %v489 = vadd.f32 %v420, %v488
        %v490 = vpop.f32.mrb[0].mxu0
        %491 = vdwg.mxu0
        %s492 = sld [smem:[#allocation8 + %s30]]
        %v493 = vstv %s492
        %v494 = vmul.f32 %v489, %v493
        %vm495 = vcmask 64512
        %496 = vst.msk [vmem:[%s319] sm:$0xff] %vm495, %v494
        %s497 = sand.u32 %s183, 1
        %s498 = scalar_lea.sflag [#allocation4], %s497
        %s499 = sand.u32 %s183, 1
        %s500 = smul.addr %s499, 8
        %s501 = scalar_lea.vmem [#allocation9], %s500
        // Predicated region
        $region57: #{tpu_custom_call.1} parent=43 // pred_check
          %p502 = pneg %p193
        $region58: #{tpu_custom_call.1} parent=43 // pred_check_branch
          %504 = sbr.rel (%p502) target = $region60
        $region59: #{tpu_custom_call.1} parent=43 // pred_region
          %s506 = ssub.s32 128, 128
          %507 = vsyncadd %s498, %s506
          %s508 = sadd.s32 %s29, %s30
          %s509 = smul.addr %s508, 128
          %s510 = scalar_lea.hbm %s6, %s509
          %s512 = sshll.u32 %s501, 4
          %s513 = int_to_ptr.vmem [resolvable:$true] %s512
          %515 = dma.vmem_to_hbm [thread:$0]  %s513, 128, %s510, %s498
        $region60: #{tpu_custom_call.1} parent=43 // pred_fallthru
          _
      $region44: #{tpu_custom_call.1} parent=5 // pred_fallthru
        _
      %p516 = scmp.le.s32.totalorder 2, %s20
      // Predicated region
      $region61: #{tpu_custom_call.1} parent=5 // pred_check
        %p517 = pneg %p516
      $region62: #{tpu_custom_call.1} parent=5 // pred_check_branch
        %519 = sbr.rel (%p517) target = $region64
      $region63: #{tpu_custom_call.1} parent=5 // pred_region
        %s520 = ssub.s32 %s20, 2
        // Predicated region
        $region65: #{tpu_custom_call.1} parent=63 // pred_check
          %p521 = pneg %p199
        $region66: #{tpu_custom_call.1} parent=63 // pred_check_branch
          %523 = sbr.rel (%p521) target = $region68
        $region67: #{tpu_custom_call.1} parent=63 // pred_region
          %s524 = sand.u32 %s184, 1
          %s525 = scalar_lea.sflag [#allocation4], %s524
          %s526 = sand.u32 %s184, 1
          %s527 = smul.addr %s526, 8
          %s528 = scalar_lea.vmem [#allocation9], %s527
          %529 = dma.done %s525, 128
        $region68: #{tpu_custom_call.1} parent=63 // pred_fallthru
          _
      $region64: #{tpu_custom_call.1} parent=5 // pred_fallthru
        _
    $region6: #{tpu_custom_call.1} parent=1 // loop_footer
      %s24 = sadd.s32 1, %s20
    $region7: #{tpu_custom_call.1} parent=1 // loop_footer_branch
      %19 = sbr.rel target = $region3
    $region8: #{tpu_custom_call.1} parent=1 // loop_exit
      _
    %530 = vsyncpa [#allocation3], 1
    %s531 = scalar_lea.sflag [#allocation3], 1
    %532 = vsyncpa %s531, 1
    %533 = vsyncpa [#allocation7], 1
    %s534 = scalar_lea.sflag [#allocation7], 1
    %535 = vsyncpa %s534, 1
    %536 = vsyncpa [#allocation4], 1
    %s537 = scalar_lea.sflag [#allocation4], 1
    %538 = vsyncpa %s537, 1
    %539 = vsyncpa [#allocation5], 1
    %s540 = scalar_lea.sflag [#allocation5], 1
    %541 = vsyncpa %s540, 1

</llo_original>
